<compile_context>
chip_gen: v7x
topology: tpu7x:2x2x1
jax: 0.10.0
libtpu: 0.0.40
codegen_flags: <defaults>
</compile_context>

<pallas_src>
import functools

import jax
import jax.numpy as jnp
from jax import lax
from jax.experimental import pallas as pl
from jax.experimental.pallas import tpu as pltpu


_INV_SQRT2 = 0.7071067811865476
_SQRT_2_OVER_PI = 0.7978845608028654


def _round_up(n, m):
    return ((n + m - 1) // m) * m


def _pick_block_h(H, tile_h):
    """Hidden-chunk size for the in-kernel loop (128-lane aligned, prefer 256)."""
    hp_min = _round_up(H, 128)
    bh = _round_up(max(128, int(tile_h)), 128)
    if bh >= 256:
        bh = _round_up(bh, 256)          # full MXU tiles on v6e/v7x
    return min(bh, hp_min)


def _pick_tile_m(M, tile_m, compute_dtype):
    """M-tile rows: 256-multiples (16-aligned for bf16), >=2 tiles when possible."""
    row_align = 16 if jnp.dtype(compute_dtype) == jnp.dtype(jnp.bfloat16) else 8
    if M <= 256:
        return _round_up(M, row_align)
    tile_m = max(256, _round_up(int(tile_m), 256))
    tile_m = min(tile_m, _round_up(M, 256))
    # Keep at least 2 M-tiles so the "parallel" axis shards across v7x's 2 TCs.
    while tile_m > 256 and (_round_up(M, tile_m) // tile_m) < 2:
        tile_m = max(256, _round_up(tile_m // 2, 256))
    return tile_m


def _ffn_kernel(x_ref, w1_ref, b1_ref, w2_ref, b2_ref, o_ref, *scratch,
                block_h, compute_dtype, approximate_gelu):
    # x_ref:  (TM, Dp)  input dtype (cast to compute dtype per tile, in VMEM)
    # w1_ref: (Dp, Hp)  compute dtype, VMEM-resident (constant block index)
    # b1_ref: (1,  Hp)  f32
    # w2_ref: (Hp, Dp)  compute dtype, VMEM-resident
    # b2_ref: (1,  Dp)  f32
    # o_ref:  (TM, Dp)  output dtype
    # scratch: optional (TM, Dp) f32 accumulator (only when >1 hidden chunk)
    acc_ref = scratch[0] if scratch else None
    Hp = w1_ref.shape[1]
    chunk_starts = list(range(0, Hp, block_h))
    n_chunks = len(chunk_starts)

    # Per-tile cast to the MXU operand dtype (bf16 fast path); hidden under MXU.
    x = x_ref[...].astype(compute_dtype)

    for c, lo in enumerate(chunk_starts):
        hs = min(block_h, Hp - lo)

        # Linear 1, one hidden slice: (TM, Dp) @ (Dp, hs) -> f32 on the MXU.
        h = jnp.dot(x, w1_ref[:, lo:lo + hs], preferred_element_type=jnp.float32)
        h = h + b1_ref[:, lo:lo + hs]

        if approximate_gelu:
            # tanh GELU: transcendental goes to the EUP slot (cheap on v6e/v7x).
            h = 0.5 * h * (1.0 + jnp.tanh(_SQRT_2_OVER_PI * (h + 0.044715 * (h * h * h))))
        else:
            # Exact erf GELU in f32 — matches torch.nn.GELU() default numerics.
            h = 0.5 * h * (1.0 + lax.erf(h * jnp.float32(_INV_SQRT2)))

        # Dropout(p=0.0) -> identity (elided).

        # Linear 2 partial sum for this hidden slice: (TM, hs) @ (hs, Dp) -> f32.
        part = jnp.dot(h.astype(w2_ref.dtype), w2_ref[lo:lo + hs, :],
                       preferred_element_type=jnp.float32)

        if n_chunks == 1:
            o_ref[...] = (part + b2_ref[...]).astype(o_ref.dtype)
        elif c == 0:
            acc_ref[...] = part
        elif c < n_chunks - 1:
            acc_ref[...] += part
        else:
            o_ref[...] = (acc_ref[...] + part + b2_ref[...]).astype(o_ref.dtype)


def prepare_params(w1, b1, w2, b2, *, compute_dtype=jnp.bfloat16):
    """One-time parameter prep (hoisted out of the per-call path):
    pad D/H to 128 multiples and cast the matmul weights to the compute dtype."""
    D, H = w1.shape
    Dp = _round_up(D, 128)
    Hp = _round_up(H, 128)
    w1p = jnp.pad(w1, ((0, Dp - D), (0, Hp - H))).astype(compute_dtype)
    w2p = jnp.pad(w2, ((0, Hp - H), (0, Dp - D))).astype(compute_dtype)
    b1p = jnp.pad(b1, ((0, Hp - H),)).reshape(1, Hp).astype(jnp.float32)
    b2p = jnp.pad(b2, ((0, Dp - D),)).reshape(1, Dp).astype(jnp.float32)
    return w1p, b1p, w2p, b2p


@functools.partial(
    jax.jit,
    static_argnames=("block_h", "tile_m", "compute_dtype", "approximate_gelu"))
def feed_forward_prepared(x, w1p, b1p, w2p, b2p, *, block_h, tile_m=1024,
                          compute_dtype=jnp.bfloat16, approximate_gelu=False):
    """x: (B, S, D) unpadded/uncast; w1p/b1p/w2p/b2p from prepare_params()."""
    B, S, D = x.shape
    M = B * S
    out_dtype = x.dtype
    Dp = w2p.shape[1]
    Hp = w1p.shape[1]
    n_h = -(-Hp // block_h)

    tile_m = _pick_tile_m(M, tile_m, compute_dtype)
    Mp = _round_up(M, tile_m)

    x2 = x.reshape(M, D)
    if Mp != M or Dp != D:
        # Zero padding contributes exactly zero to every dot product; padded
        # output rows/cols are sliced off below.
        x2 = jnp.pad(x2, ((0, Mp - M), (0, Dp - D)))

    grid = (Mp // tile_m,)
    scratch = [pltpu.VMEM((tile_m, Dp), jnp.float32)] if n_h > 1 else []

    # Explicit scoped-VMEM limit (v5e default ~16 MiB; v7x default 32 of 64 MiB).
    cbytes = jnp.dtype(compute_dtype).itemsize
    xbytes = jnp.dtype(x.dtype).itemsize
    obytes = jnp.dtype(out_dtype).itemsize
    est = (2 * tile_m * Dp * (xbytes + obytes)       # x / out double buffers
           + 2 * 2 * Hp * Dp * cbytes                # resident w1 + w2 buffers
           + 2 * 2 * (Hp + Dp) * 4                   # biases
           + (tile_m * Dp * 4 if n_h > 1 else 0)     # f32 accumulator scratch
           + 4 * tile_m * min(block_h, Hp) * 4)      # hidden-activation temps
    vmem_limit = int(min(128 * 2**20, max(32 * 2**20, est * 5 // 4)))

    out = pl.pallas_call(
        functools.partial(_ffn_kernel, block_h=block_h,
                          compute_dtype=compute_dtype,
                          approximate_gelu=approximate_gelu),
        out_shape=jax.ShapeDtypeStruct((Mp, Dp), out_dtype),
        grid_spec=pltpu.PrefetchScalarGridSpec(
            num_scalar_prefetch=0,
            grid=grid,
            in_specs=[
                pl.BlockSpec((tile_m, Dp), lambda i: (i, 0)),  # x: streamed over M
                pl.BlockSpec((Dp, Hp), lambda i: (0, 0)),      # w1: fetched once (resident)
                pl.BlockSpec((1, Hp), lambda i: (0, 0)),       # b1
                pl.BlockSpec((Hp, Dp), lambda i: (0, 0)),      # w2: fetched once (resident)
                pl.BlockSpec((1, Dp), lambda i: (0, 0)),       # b2
            ],
            out_specs=pl.BlockSpec((tile_m, Dp), lambda i: (i, 0)),
            scratch_shapes=scratch,
        ),
        compiler_params=pltpu.CompilerParams(
            dimension_semantics=("parallel",),   # M tiles shard across TensorCores
            vmem_limit_bytes=vmem_limit,
        ),
    )(x2, w1p, b1p, w2p, b2p)

    return out[:M, :D].reshape(B, S, D)


def feed_forward(x, w1, b1, w2, b2, *, tile_m=1024, tile_h=512,
                 compute_dtype=jnp.bfloat16, approximate_gelu=False):
    """Convenience wrapper. For repeated calls, run prepare_params() once at
    setup and call feed_forward_prepared() directly (avoids per-call weight
    pad/cast HBM traffic)."""
    H = w1.shape[1]
    block_h = _pick_block_h(H, tile_h)
    params = prepare_params(w1, b1, w2, b2, compute_dtype=compute_dtype)
    return feed_forward_prepared(x, *params, block_h=block_h, tile_m=tile_m,
                                 compute_dtype=compute_dtype,
                                 approximate_gelu=approximate_gelu)


def _reference(x, w1, b1, w2, b2):
    h = jnp.dot(x, w1) + b1
    h = jax.nn.gelu(h, approximate=False)
    return jnp.dot(h, w2) + b2


if __name__ == "__main__":
    key = jax.random.PRNGKey(0)

    def make(k, B, S, D, H):
        kx, kw1, kb1, kw2, kb2 = jax.random.split(k, 5)
        x = jax.random.normal(kx, (B, S, D), dtype=jnp.float32)
        w1 = jax.random.normal(kw1, (D, H), dtype=jnp.float32) * 0.02
        b1 = jax.random.normal(kb1, (H,), dtype=jnp.float32) * 0.02
        w2 = jax.random.normal(kw2, (H, D), dtype=jnp.float32) * 0.02
        b2 = jax.random.normal(kb2, (D,), dtype=jnp.float32) * 0.02
        return x, w1, b1, w2, b2

    k1, k2 = jax.random.split(key)

    # Config 1: small ViT FeedForward block (single hidden chunk, single M tile).
    x, w1, b1, w2, b2 = make(k1, 2, 8, 32, 64)
    y_ref = _reference(x, w1, b1, w2, b2)

    # Fast path: bf16 MXU operands (cast per tile in-kernel), f32 accumulation.
    y_fast = jax.block_until_ready(feed_forward(x, w1, b1, w2, b2))
    assert y_fast.shape == x.shape
    assert jnp.allclose(y_fast, y_ref, atol=2e-2, rtol=2e-2), "bf16 path mismatch"

    # Exact path: f32 end-to-end (matches torch Linear/GELU numerics).
    y_exact = jax.block_until_ready(
        feed_forward(x, w1, b1, w2, b2, compute_dtype=jnp.float32))
    assert jnp.allclose(y_exact, y_ref, atol=2e-5, rtol=2e-5), "f32 path mismatch"

    # Optional tanh-approximate GELU (EUP) path — looser tolerance vs exact ref.
    y_tanh = jax.block_until_ready(
        feed_forward(x, w1, b1, w2, b2, approximate_gelu=True))
    assert jnp.allclose(y_tanh, y_ref, atol=3e-2, rtol=3e-2), "tanh GELU mismatch"

    # Config 2: exercises the multi-M-tile grid (with M padding) and the
    # multi-chunk hidden loop with the f32 accumulator scratch.
    x2, w12, b12, w22, b22 = make(k2, 2, 136, 32, 256)
    y2_ref = _reference(x2, w12, b12, w22, b22)
    y2 = jax.block_until_ready(
        feed_forward(x2, w12, b12, w22, b22, tile_h=128, compute_dtype=jnp.float32))
    assert y2.shape == x2.shape
    assert jnp.allclose(y2, y2_ref, atol=2e-5, rtol=2e-5), "multi-tile path mismatch"

    print("KERNEL_OK")
</pallas_src>

<mosaic_0001>
module attributes {stable_mosaic.version = 11 : i64} {
  func.func @_ffn_kernel(%arg0: i32, %arg1: memref<16x128xf32, #tpu.memory_space<vmem>>, %arg2: memref<128x128xbf16, #tpu.memory_space<vmem>>, %arg3: memref<1x128xf32, #tpu.memory_space<vmem>>, %arg4: memref<128x128xbf16, #tpu.memory_space<vmem>>, %arg5: memref<1x128xf32, #tpu.memory_space<vmem>>, %arg6: memref<16x128xf32, #tpu.memory_space<vmem>>) attributes {dimension_semantics = [#tpu.dimension_semantics<parallel>], iteration_bounds = array<i64: 1>, scalar_prefetch = 0 : i64, scratch_operands = 0 : i64, tpu.core_type = #tpu.core_type<tc>, window_params = [{transform_indices = @transform_0, window_bounds = array<i64: 16, 128>}, {pipeline_mode = #tpu.pipeline_mode<synchronous>, transform_indices = @transform_1, window_bounds = array<i64: 128, 128>}, {pipeline_mode = #tpu.pipeline_mode<synchronous>, transform_indices = @transform_2, window_bounds = array<i64: 1, 128>}, {pipeline_mode = #tpu.pipeline_mode<synchronous>, transform_indices = @transform_3, window_bounds = array<i64: 128, 128>}, {pipeline_mode = #tpu.pipeline_mode<synchronous>, transform_indices = @transform_4, window_bounds = array<i64: 1, 128>}, {transform_indices = @transform_5, window_bounds = array<i64: 16, 128>}]} {
    %c0 = arith.constant 0 : index
    %c0_0 = arith.constant 0 : index
    %0 = vector.load %arg1[%c0, %c0_0] : memref<16x128xf32, #tpu.memory_space<vmem>>, vector<16x128xf32>
    %1 = arith.truncf %0 : vector<16x128xf32> to vector<16x128xbf16>
    %c0_1 = arith.constant 0 : index
    %c0_2 = arith.constant 0 : index
    %2 = vector.load %arg2[%c0_1, %c0_2] : memref<128x128xbf16, #tpu.memory_space<vmem>>, vector<128x128xbf16>
    %cst = arith.constant dense<0.000000e+00> : vector<16x128xf32>
    %3 = tpu.matmul %1, %2, %cst {dimension_numbers = #tpu.dot_dimension_numbers<[1], [0], [0], [1], [0, 0, 1, 1], [], []>} : vector<16x128xbf16>, vector<128x128xbf16>, vector<16x128xf32> -> vector<16x128xf32>
    %c0_3 = arith.constant 0 : index
    %c0_4 = arith.constant 0 : index
    %4 = vector.load %arg3[%c0_3, %c0_4] : memref<1x128xf32, #tpu.memory_space<vmem>>, vector<1x128xf32>
    %5 = vector.broadcast %4 : vector<1x128xf32> to vector<16x128xf32>
    %6 = arith.addf %3, %5 : vector<16x128xf32>
    %cst_5 = arith.constant 5.000000e-01 : f32
    %7 = vector.broadcast %cst_5 : f32 to vector<16x128xf32>
    %8 = arith.mulf %7, %6 : vector<16x128xf32>
    %cst_6 = arith.constant 0.707106769 : f32
    %9 = vector.broadcast %cst_6 : f32 to vector<16x128xf32>
    %10 = arith.mulf %6, %9 : vector<16x128xf32>
    %11 = math.erf %10 : vector<16x128xf32>
    %cst_7 = arith.constant 1.000000e+00 : f32
    %12 = vector.broadcast %cst_7 : f32 to vector<16x128xf32>
    %13 = arith.addf %12, %11 : vector<16x128xf32>
    %14 = arith.mulf %8, %13 : vector<16x128xf32>
    %15 = arith.truncf %14 : vector<16x128xf32> to vector<16x128xbf16>
    %c0_8 = arith.constant 0 : index
    %c0_9 = arith.constant 0 : index
    %16 = vector.load %arg4[%c0_8, %c0_9] : memref<128x128xbf16, #tpu.memory_space<vmem>>, vector<128x128xbf16>
    %cst_10 = arith.constant dense<0.000000e+00> : vector<16x128xf32>
    %17 = tpu.matmul %15, %16, %cst_10 {dimension_numbers = #tpu.dot_dimension_numbers<[1], [0], [0], [1], [0, 0, 1, 1], [], []>} : vector<16x128xbf16>, vector<128x128xbf16>, vector<16x128xf32> -> vector<16x128xf32>
    %c0_11 = arith.constant 0 : index
    %c0_12 = arith.constant 0 : index
    %18 = vector.load %arg5[%c0_11, %c0_12] : memref<1x128xf32, #tpu.memory_space<vmem>>, vector<1x128xf32>
    %19 = vector.broadcast %18 : vector<1x128xf32> to vector<16x128xf32>
    %20 = arith.addf %17, %19 : vector<16x128xf32>
    %c0_13 = arith.constant 0 : index
    %c0_14 = arith.constant 0 : index
    %21 = vector.load %arg6[%c0_13, %c0_14] : memref<16x128xf32, #tpu.memory_space<vmem>>, vector<16x128xf32>
    tpu.vector_store %arg6[%c0_13, %c0_14], %20 {strides = array<i32>} : memref<16x128xf32, #tpu.memory_space<vmem>>, vector<16x128xf32>,
    return
  }
  func.func @transform_0(%arg0: i32) -> (i32, i32) {
    %c0_i32 = arith.constant 0 : i32
    %c0_i32_0 = arith.constant 0 : i32
    return %arg0, %c0_i32 : i32, i32
  }
  func.func @transform_1(%arg0: i32) -> (i32, i32) {
    %c0_i32 = arith.constant 0 : i32
    %c0_i32_0 = arith.constant 0 : i32
    %c0_i32_1 = arith.constant 0 : i32
    return %c0_i32, %c0_i32_0 : i32, i32
  }
  func.func @transform_2(%arg0: i32) -> (i32, i32) {
    %c0_i32 = arith.constant 0 : i32
    %c0_i32_0 = arith.constant 0 : i32
    %c0_i32_1 = arith.constant 0 : i32
    return %c0_i32, %c0_i32_0 : i32, i32
  }
  func.func @transform_3(%arg0: i32) -> (i32, i32) {
    %c0_i32 = arith.constant 0 : i32
    %c0_i32_0 = arith.constant 0 : i32
    %c0_i32_1 = arith.constant 0 : i32
    return %c0_i32, %c0_i32_0 : i32, i32
  }
  func.func @transform_4(%arg0: i32) -> (i32, i32) {
    %c0_i32 = arith.constant 0 : i32
    %c0_i32_0 = arith.constant 0 : i32
    %c0_i32_1 = arith.constant 0 : i32
    return %c0_i32, %c0_i32_0 : i32, i32
  }
  func.func @transform_5(%arg0: i32) -> (i32, i32) {
    %c0_i32 = arith.constant 0 : i32
    %c0_i32_0 = arith.constant 0 : i32
    return %arg0, %c0_i32 : i32, i32
  }
}

</mosaic_0001>

<llo_original>
// kernel: feed_forward_prepared.1
$region0: #{feed_forward_prepared.1}
  #allocation0 [shape = 'u32[]', space=smem, size = 0x4, offset = 0x4, fixed_abs, tag = 'smem constant byte address 0x4 - core index']
  #allocation1 [shape = 'u32[144,128]{1,0:T(1,128)}', space=vmem, size = 0x12000, scoped, tag = 'internal scratch']
  %s0 = inlined_call_operand.vmem [shape: f32[16,128], index: 0, kind: input, shape index: {}]
  %s1 = inlined_call_operand.hbm [shape: bf16[128,128], index: 1, kind: input, shape index: {}]
  %s2 = inlined_call_operand.vmem [shape: f32[1,128], index: 2, kind: input, shape index: {}]
  %s3 = inlined_call_operand.hbm [shape: bf16[128,128], index: 3, kind: input, shape index: {}]
  %s4 = inlined_call_operand.vmem [shape: f32[1,128], index: 4, kind: input, shape index: {}]
  %s5 = inlined_call_operand.vmem [shape: f32[16,128], index: 5, kind: output, shape index: {}]
  %s6 = sld [smem:[#allocation0]]
  $region38: #{feed_forward_prepared.1} parent=0
    _
  %s8 = ssub.s32 1, %s6
  %s9 = scalar_select 0, %s8, %s6
  $region1: #{feed_forward_prepared.1} parent=0
    #allocation2 [shape = 'u8[32768]{0}', space=vmem, size = 0x8000, scoped, tag = 'input window, operand 1, single buffered']
    #allocation3 [shape = 's32[1]{0}', space=sflag, size = 0x4, scoped, tag = 'scoped memory for feed_forward_prepared.1']
    #allocation4 [shape = 'u8[32768]{0}', space=vmem, size = 0x8000, scoped, tag = 'input window, operand 3, single buffered']
    #allocation5 [shape = 's32[1]{0}', space=sflag, size = 0x4, scoped, tag = 'scoped memory for feed_forward_prepared.1']
    %10 = vsyncpa [#allocation3], 0
    %11 = vsyncpa [#allocation5], 0
    // Predicated region
    $region2: #{feed_forward_prepared.1} parent=1 // pred_check
      _
    $region3: #{feed_forward_prepared.1} parent=1 // pred_check_branch
      %13 = sbr.rel (0) target = $region5
    $region4: #{feed_forward_prepared.1} parent=1 // pred_region
      _
    $region5: #{feed_forward_prepared.1} parent=1 // pred_fallthru
      _
    // Predicated region
    $region6: #{feed_forward_prepared.1} parent=1 // pred_check
      _
    $region7: #{feed_forward_prepared.1} parent=1 // pred_check_branch
      %15 = sbr.rel (0) target = $region9
    $region8: #{feed_forward_prepared.1} parent=1 // pred_region
      %s17 = ssub.s32 1024, 1024
      %18 = vsyncadd [#allocation3], %s17
      %s19 = sshll.u32 [#allocation2], 4
      %s20 = int_to_ptr.vmem [resolvable:$true] %s19
      %25 = dma.hbm_to_vmem [thread:$0]  %s1, 1024, %s20, [#allocation3], 64, 64, 4
    $region9: #{feed_forward_prepared.1} parent=1 // pred_fallthru
      _
    // Predicated region
    $region10: #{feed_forward_prepared.1} parent=1 // pred_check
      _
    $region11: #{feed_forward_prepared.1} parent=1 // pred_check_branch
      %27 = sbr.rel (0) target = $region13
    $region12: #{feed_forward_prepared.1} parent=1 // pred_region
      _
    $region13: #{feed_forward_prepared.1} parent=1 // pred_fallthru
      _
    // Predicated region
    $region14: #{feed_forward_prepared.1} parent=1 // pred_check
      _
    $region15: #{feed_forward_prepared.1} parent=1 // pred_check_branch
      %29 = sbr.rel (0) target = $region17
    $region16: #{feed_forward_prepared.1} parent=1 // pred_region
      %s31 = ssub.s32 1024, 1024
      %32 = vsyncadd [#allocation5], %s31
      %s33 = sshll.u32 [#allocation4], 4
      %s34 = int_to_ptr.vmem [resolvable:$true] %s33
      %39 = dma.hbm_to_vmem [thread:$0]  %s3, 1024, %s34, [#allocation5], 64, 64, 4
    $region17: #{feed_forward_prepared.1} parent=1 // pred_fallthru
      _
    // Predicated region
    $region18: #{feed_forward_prepared.1} parent=1 // pred_check
      _
    $region19: #{feed_forward_prepared.1} parent=1 // pred_check_branch
      %41 = sbr.rel (0) target = $region21
    $region20: #{feed_forward_prepared.1} parent=1 // pred_region
      _
    $region21: #{feed_forward_prepared.1} parent=1 // pred_fallthru
      _
    // Predicated region
    $region22: #{feed_forward_prepared.1} parent=1 // pred_check
      _
    $region23: #{feed_forward_prepared.1} parent=1 // pred_check_branch
      %43 = sbr.rel (0) target = $region25
    $region24: #{feed_forward_prepared.1} parent=1 // pred_region
      %44 = dma.done [#allocation3], 1024
    $region25: #{feed_forward_prepared.1} parent=1 // pred_fallthru
      _
    // Predicated region
    $region26: #{feed_forward_prepared.1} parent=1 // pred_check
      _
    $region27: #{feed_forward_prepared.1} parent=1 // pred_check_branch
      %46 = sbr.rel (0) target = $region29
    $region28: #{feed_forward_prepared.1} parent=1 // pred_region
      %47 = dma.done [#allocation5], 1024
    $region29: #{feed_forward_prepared.1} parent=1 // pred_fallthru
      _
    %v49 = vld [vmem:[%s0] sm:$0xff]
    %v50 = vld [vmem:[%s0 + $0x8] sm:$0xff]
    %v51 = vpack.c.bf16 %v50, %v49
    %v52 = vld [vmem:[#allocation2] sm:$0xf]
    %v53 = vld [vmem:[#allocation2 + $0x4] sm:$0xf]
    %v54 = vld [vmem:[#allocation2 + $0x8] sm:$0xf]
    %v55 = vld [vmem:[#allocation2 + $0xc] sm:$0xf]
    %v56 = vld [vmem:[#allocation2 + $0x10] sm:$0xf]
    %v57 = vld [vmem:[#allocation2 + $0x14] sm:$0xf]
    %v58 = vld [vmem:[#allocation2 + $0x18] sm:$0xf]
    %v59 = vld [vmem:[#allocation2 + $0x1c] sm:$0xf]
    %v60 = vld [vmem:[#allocation2 + $0x20] sm:$0xf]
    %v61 = vld [vmem:[#allocation2 + $0x24] sm:$0xf]
    %v62 = vld [vmem:[#allocation2 + $0x28] sm:$0xf]
    %v63 = vld [vmem:[#allocation2 + $0x2c] sm:$0xf]
    %v64 = vld [vmem:[#allocation2 + $0x30] sm:$0xf]
    %v65 = vld [vmem:[#allocation2 + $0x34] sm:$0xf]
    %v66 = vld [vmem:[#allocation2 + $0x38] sm:$0xf]
    %v67 = vld [vmem:[#allocation2 + $0x3c] sm:$0xf]
    %v68 = vld [vmem:[%s2] sm:$0x1]
    %v70 = vlaneseq
    %v71 = vshrl.u32 %v70, 7
    %v72 = vsub.s32 0, %v71
    %v73 = vrot.slane %v68, %v72
    %v91 = vunpack.c.l.b16 %v52
    %v92 = vunpack.c.l.b16 %v53
    %v93 = vunpack.c.l.b16 %v54
    %v94 = vunpack.c.l.b16 %v55
    %v95 = vunpack.c.l.b16 %v56
    %v96 = vunpack.c.l.b16 %v57
    %v97 = vunpack.c.l.b16 %v58
    %v98 = vunpack.c.l.b16 %v59
    %v99 = vunpack.c.l.b16 %v60
    %v100 = vunpack.c.l.b16 %v61
    %v101 = vunpack.c.l.b16 %v62
    %v102 = vunpack.c.l.b16 %v63
    %v103 = vunpack.c.l.b16 %v64
    %v104 = vunpack.c.l.b16 %v65
    %v105 = vunpack.c.l.b16 %v66
    %v106 = vunpack.c.l.b16 %v67
    %v107 = vpack.c.b16 %v92, %v91
    %v108 = vpack.c.b16 %v94, %v93
    %v109 = vpack.c.b16 %v96, %v95
    %v110 = vpack.c.b16 %v98, %v97
    %v111 = vpack.c.b16 %v100, %v99
    %v112 = vpack.c.b16 %v102, %v101
    %v113 = vpack.c.b16 %v104, %v103
    %v114 = vpack.c.b16 %v106, %v105
    %123 = vmatprep.subr.bf16.mxu0 0
    %124 = vmatpush1.bf16.msra.mxu0 %v107
    %125 = vmatprep.subr.bf16.mxu0 0
    %126 = vmatpush1.bf16.msra.mxu0 %v108
    %127 = vmatprep.subr.bf16.mxu0 0
    %128 = vmatpush1.bf16.msra.mxu0 %v109
    %129 = vmatprep.subr.bf16.mxu0 0
    %130 = vmatpush1.bf16.msra.mxu0 %v110
    %131 = vmatprep.subr.bf16.mxu0 0
    %132 = vmatpush1.bf16.msra.mxu0 %v111
    %133 = vmatprep.subr.bf16.mxu0 0
    %134 = vmatpush1.bf16.msra.mxu0 %v112
    %135 = vmatprep.subr.bf16.mxu0 0
    %136 = vmatpush1.bf16.msra.mxu0 %v113
    %137 = vmatprep.subr.bf16.mxu0 0
    %138 = vmatpush1.bf16.msra.mxu0 %v114
    %139 = vmatprep.subr.bf16.mxu0 0
    %140 = vmatpush1.bf16.msra.mxu0 0
    %141 = vmatprep.subr.bf16.mxu0 0
    %142 = vmatpush1.bf16.msra.mxu0 0
    %143 = vmatprep.subr.bf16.mxu0 0
    %144 = vmatpush1.bf16.msra.mxu0 0
    %145 = vmatprep.subr.bf16.mxu0 0
    %146 = vmatpush1.bf16.msra.mxu0 0
    %147 = vmatprep.subr.bf16.mxu0 0
    %148 = vmatpush1.bf16.msra.mxu0 0
    %149 = vmatprep.subr.bf16.mxu0 0
    %150 = vmatpush1.bf16.msra.mxu0 0
    %151 = vmatprep.subr.bf16.mxu0 0
    %152 = vmatpush1.bf16.msra.mxu0 0
    %153 = vmatprep.subr.bf16.mxu0 0
    %154 = vmatpush1.bf16.msra.mxu0 0
    %155 = vmatprep.mubr.bf16.mxu0 0
    %156 = vmatmul.mubr.bf16.gmra.mrb[0].mxu0 %v51
    %v157 = vpop.f32.mrb[0].mxu0
    %v158 = vadd.f32 %v73, %v157
    %v159 = vpop.f32.mrb[0].mxu0
    %v160 = vpop.f32.mrb[0].mxu0
    %v161 = vadd.f32 %v73, %v160
    %v162 = vpop.f32.mrb[0].mxu0
    %163 = vdwg.mxu0
    %v164 = vmul.f32 %v158, 0.5
    %v165 = vmul.f32 %v161, 0.5
    %v166 = vmul.f32 %v158, 0.70710677
    %v167 = vmul.f32 %v161, 0.70710677
    %v168 = verf.f32.pop %v166
    %v169 = verf.f32.pop %v167
    %v170 = vadd.f32 %v168, 1.0
    %v171 = vadd.f32 %v169, 1.0
    %v172 = vmul.f32 %v164, %v170
    %v173 = vmul.f32 %v165, %v171
    %v174 = vpack.c.bf16 %v173, %v172
    %v175 = vld [vmem:[#allocation4] sm:$0xf]
    %v176 = vld [vmem:[#allocation4 + $0x4] sm:$0xf]
    %v177 = vld [vmem:[#allocation4 + $0x8] sm:$0xf]
    %v178 = vld [vmem:[#allocation4 + $0xc] sm:$0xf]
    %v179 = vld [vmem:[#allocation4 + $0x10] sm:$0xf]
    %v180 = vld [vmem:[#allocation4 + $0x14] sm:$0xf]
    %v181 = vld [vmem:[#allocation4 + $0x18] sm:$0xf]
    %v182 = vld [vmem:[#allocation4 + $0x1c] sm:$0xf]
    %v183 = vld [vmem:[#allocation4 + $0x20] sm:$0xf]
    %v184 = vld [vmem:[#allocation4 + $0x24] sm:$0xf]
    %v185 = vld [vmem:[#allocation4 + $0x28] sm:$0xf]
    %v186 = vld [vmem:[#allocation4 + $0x2c] sm:$0xf]
    %v187 = vld [vmem:[#allocation4 + $0x30] sm:$0xf]
    %v188 = vld [vmem:[#allocation4 + $0x34] sm:$0xf]
    %v189 = vld [vmem:[#allocation4 + $0x38] sm:$0xf]
    %v190 = vld [vmem:[#allocation4 + $0x3c] sm:$0xf]
    %v191 = vld [vmem:[%s4] sm:$0x1]
    %v193 = vlaneseq
    %v194 = vshrl.u32 %v193, 7
    %v195 = vsub.s32 0, %v194
    %v196 = vrot.slane %v191, %v195
    %v214 = vunpack.c.l.b16 %v175
    %v215 = vunpack.c.l.b16 %v176
    %v216 = vunpack.c.l.b16 %v177
    %v217 = vunpack.c.l.b16 %v178
    %v218 = vunpack.c.l.b16 %v179
    %v219 = vunpack.c.l.b16 %v180
    %v220 = vunpack.c.l.b16 %v181
    %v221 = vunpack.c.l.b16 %v182
    %v222 = vunpack.c.l.b16 %v183
    %v223 = vunpack.c.l.b16 %v184
    %v224 = vunpack.c.l.b16 %v185
    %v225 = vunpack.c.l.b16 %v186
    %v226 = vunpack.c.l.b16 %v187
    %v227 = vunpack.c.l.b16 %v188
    %v228 = vunpack.c.l.b16 %v189
    %v229 = vunpack.c.l.b16 %v190
    %v230 = vpack.c.b16 %v215, %v214
    %v231 = vpack.c.b16 %v217, %v216
    %v232 = vpack.c.b16 %v219, %v218
    %v233 = vpack.c.b16 %v221, %v220
    %v234 = vpack.c.b16 %v223, %v222
    %v235 = vpack.c.b16 %v225, %v224
    %v236 = vpack.c.b16 %v227, %v226
    %v237 = vpack.c.b16 %v229, %v228
    %246 = vmatprep.subr.bf16.mxu0 0
    %247 = vmatpush1.bf16.msra.mxu0 %v230
    %248 = vmatprep.subr.bf16.mxu0 0
    %249 = vmatpush1.bf16.msra.mxu0 %v231
    %250 = vmatprep.subr.bf16.mxu0 0
    %251 = vmatpush1.bf16.msra.mxu0 %v232
    %252 = vmatprep.subr.bf16.mxu0 0
    %253 = vmatpush1.bf16.msra.mxu0 %v233
    %254 = vmatprep.subr.bf16.mxu0 0
    %255 = vmatpush1.bf16.msra.mxu0 %v234
    %256 = vmatprep.subr.bf16.mxu0 0
    %257 = vmatpush1.bf16.msra.mxu0 %v235
    %258 = vmatprep.subr.bf16.mxu0 0
    %259 = vmatpush1.bf16.msra.mxu0 %v236
    %260 = vmatprep.subr.bf16.mxu0 0
    %261 = vmatpush1.bf16.msra.mxu0 %v237
    %262 = vmatprep.subr.bf16.mxu0 0
    %263 = vmatpush1.bf16.msra.mxu0 0
    %264 = vmatprep.subr.bf16.mxu0 0
    %265 = vmatpush1.bf16.msra.mxu0 0
    %266 = vmatprep.subr.bf16.mxu0 0
    %267 = vmatpush1.bf16.msra.mxu0 0
    %268 = vmatprep.subr.bf16.mxu0 0
    %269 = vmatpush1.bf16.msra.mxu0 0
    %270 = vmatprep.subr.bf16.mxu0 0
    %271 = vmatpush1.bf16.msra.mxu0 0
    %272 = vmatprep.subr.bf16.mxu0 0
    %273 = vmatpush1.bf16.msra.mxu0 0
    %274 = vmatprep.subr.bf16.mxu0 0
    %275 = vmatpush1.bf16.msra.mxu0 0
    %276 = vmatprep.subr.bf16.mxu0 0
    %277 = vmatpush1.bf16.msra.mxu0 0
    %278 = vmatprep.mubr.bf16.mxu0 0
    %279 = vmatmul.mubr.bf16.gmra.mrb[0].mxu0 %v174
    %v280 = vpop.f32.mrb[0].mxu0
    %v281 = vadd.f32 %v196, %v280
    %v282 = vpop.f32.mrb[0].mxu0
    %v283 = vpop.f32.mrb[0].mxu0
    %v284 = vadd.f32 %v196, %v283
    %v285 = vpop.f32.mrb[0].mxu0
    %286 = vdwg.mxu0
    %287 = vst [vmem:[%s5] sm:$0xff] %v281
    %288 = vst [vmem:[%s5 + $0x8] sm:$0xff] %v284
    // Predicated region
    $region30: #{feed_forward_prepared.1} parent=1 // pred_check
      _
    $region31: #{feed_forward_prepared.1} parent=1 // pred_check_branch
      %290 = sbr.rel (0) target = $region33
    $region32: #{feed_forward_prepared.1} parent=1 // pred_region
      _
    $region33: #{feed_forward_prepared.1} parent=1 // pred_fallthru
      _
    // Predicated region
    $region34: #{feed_forward_prepared.1} parent=1 // pred_check
      _
    $region35: #{feed_forward_prepared.1} parent=1 // pred_check_branch
      %292 = sbr.rel (0) target = $region37
    $region36: #{feed_forward_prepared.1} parent=1 // pred_region
      _
    $region37: #{feed_forward_prepared.1} parent=1 // pred_fallthru
      _
    %293 = vsyncpa [#allocation3], 1
    %294 = vsyncpa [#allocation5], 1

</llo_original>
